<compile_context>
chip_gen: v6e
topology: v6e:2x2x1
jax: 0.10.0
libtpu: 0.0.40
codegen_flags: <defaults>
</compile_context>

<pallas_src>
import math
from functools import partial

import jax
import jax.numpy as jnp
from jax import lax
from jax.experimental import pallas as pl
from jax.experimental.pallas import tpu as pltpu

EPS = 1e-12            # models.LayerNorm variance_epsilon
VOCAB_TILE = 2048      # decoder (vocab) lane tile


# ----------------------------- in-kernel math helpers -----------------------------

def _gelu(x):
    # tanh-form GELU: the tanh goes to the EUP slot (free w.r.t. VALU); ~1e-3 max
    # deviation from the erf-form models.gelu of the PyTorch reference.
    c = 0.7978845608028654  # sqrt(2/pi)
    return 0.5 * x * (1.0 + jnp.tanh(c * (x + 0.044715 * (x * x * x))))


def _layernorm(x, g, b):
    # models.LayerNorm: biased variance, eps=1e-12; rsqrt goes to the EUP slot.
    u = jnp.mean(x, axis=-1, keepdims=True)
    s = jnp.mean(jnp.square(x - u), axis=-1, keepdims=True)
    return g * ((x - u) * lax.rsqrt(s + EPS)) + b


# ----------------------------- spec / compiler-param helpers -----------------------------

def _const_spec(shape):
    # Whole-array block whose block index never changes across the grid: single-buffer
    # it so grid-invariant weights are only resident once in VMEM (not double-buffered).
    return pl.BlockSpec(shape, lambda *_: (0,) * len(shape),
                        pipeline_mode=pl.Buffered(1))


def _vmem_cap_bytes():
    # Generation-aware cap with headroom (v7x has only 64 MiB physical VMEM).
    try:
        return max(32 << 20, int(pltpu.get_tpu_info().vmem_capacity_bytes) * 3 // 4)
    except Exception:
        pass
    try:
        kind = jax.devices()[0].device_kind.lower()
    except Exception:
        kind = ""
    phys = (64 << 20) if "7" in kind else (128 << 20)
    return max(32 << 20, phys * 3 // 4)


def _compiler_params(semantics, const_operands=(), stream_bytes=0, live_bytes=0):
    # Resident footprint: single-buffered const blocks x1, pipelined blocks x2,
    # plus an explicit budget for in-kernel intermediates, plus slack.
    const_bytes = sum(int(a.size) * a.dtype.itemsize for a in const_operands)
    need = const_bytes + 2 * stream_bytes + live_bytes + (8 << 20)
    vmem = int(min(max(need, 32 << 20), _vmem_cap_bytes()))
    return pltpu.CompilerParams(dimension_semantics=semantics,
                                vmem_limit_bytes=vmem)


def _bf16_vpu_ok():
    # v6e/v7x have a bf16 VALU; v5e does not -> keep f32 elementwise there.
    try:
        kind = jax.devices()[0].device_kind.lower()
    except Exception:
        return False
    return any(t in kind for t in ("v6", "v7", "7x"))


_ACT_DTYPE = jnp.bfloat16 if _bf16_vpu_ok() else jnp.float32


# ----------------------------- embedding add + LayerNorm kernel -----------------------------

def _embed_ln_kernel(tok_ref, pos_ref, seg_ref, g_ref, b_ref, o_ref):
    e = tok_ref[0] + pos_ref[0] + seg_ref[0]
    o_ref[0] = _layernorm(e, g_ref[...], b_ref[...])


def embed_layernorm(e_tok, e_pos, e_seg, g, b):
    B, S, D = e_tok.shape
    operands = (e_tok, e_pos, e_seg, g, b)
    stream = 4 * (3 * S * D)          # tok + seg in, out (f32 per-block)
    return pl.pallas_call(
        _embed_ln_kernel,
        out_shape=jax.ShapeDtypeStruct((B, S, D), jnp.float32),
        grid=(B,),
        in_specs=[
            pl.BlockSpec((1, S, D), lambda i: (i, 0, 0)),
            _const_spec((1, S, D)),     # positional embeddings, same for every batch row
            pl.BlockSpec((1, S, D), lambda i: (i, 0, 0)),
            _const_spec((1, D)),
            _const_spec((1, D)),
        ],
        out_specs=pl.BlockSpec((1, S, D), lambda i: (i, 0, 0)),
        compiler_params=_compiler_params(("parallel",), (e_pos, g, b), stream, 4 * S * D),
    )(*operands)


# ----------------------------- transformer block kernel -----------------------------

def _block_kernel(x_ref, mask_ref,
                  wqkv, bqkv, wo, bo,
                  g1, b1, w1, c1, w2, c2, g2, b2,
                  o_ref, *, n_heads, act_dtype):
    x = x_ref[0]                                    # [S, D] f32
    S, D = x.shape
    dh = D // n_heads
    scale = 1.0 / math.sqrt(dh)

    # Additive attention mask: [1, S], broadcast over heads and query positions.
    neg = 10000.0 * (1.0 - mask_ref[0])

    # Fused Q|K|V projection: one lane-dense N=3D MXU pass, one bf16 cast of x.
    xb = x.astype(jnp.bfloat16)
    qkv = jnp.dot(xb, wqkv[...], preferred_element_type=jnp.float32) + bqkv[...]   # [S, 3D]
    q, k, v = qkv[:, :D], qkv[:, D:2 * D], qkv[:, 2 * D:]

    # Head-major [H, S, dh] (batched einsums; no per-head 64-lane slices).
    qh = q.reshape(S, n_heads, dh).transpose(1, 0, 2).astype(jnp.bfloat16)
    kh = k.reshape(S, n_heads, dh).transpose(1, 0, 2).astype(jnp.bfloat16)
    vh = v.reshape(S, n_heads, dh).transpose(1, 0, 2).astype(jnp.bfloat16)

    # scores = q @ k^T / sqrt(dh) - 10000 * (1 - mask)
    s = jnp.einsum("hqd,hkd->hqk", qh, kh,
                   preferred_element_type=jnp.float32) * scale                     # [H, S, S] f32
    s = s - neg[None, :, :]
    s = s - jnp.max(s, axis=-1, keepdims=True)
    e = jnp.exp(s)
    p = e * pl.reciprocal(jnp.sum(e, axis=-1, keepdims=True), approx=True)         # softmax (EUP recip)

    ctx = jnp.einsum("hqk,hkd->hqd", p.astype(jnp.bfloat16), vh,
                     preferred_element_type=jnp.float32)                           # [H, S, dh] f32
    attn = ctx.transpose(1, 0, 2).reshape(S, D)                                    # [S, D]
    # TODO(synk): for S >= ~256 on v7x (>= ~1024 on v5e/v6e) switch to a key-tiled
    # online-softmax (flash) loop instead of materializing [H, S, S] scores, and add
    # a second "parallel" grid axis (query/head tiles) so both v7x TensorCores are
    # busy when B is 1 or odd.

    proj = jnp.dot(attn.astype(jnp.bfloat16), wo[...],
                   preferred_element_type=jnp.float32) + bo[...]
    x1 = _layernorm(x + proj, g1[...], b1[...])

    h_pre = jnp.dot(x1.astype(jnp.bfloat16), w1[...],
                    preferred_element_type=jnp.float32) + c1[...]
    hff = _gelu(h_pre.astype(act_dtype))            # bf16 elementwise on v6e/v7x, f32 on v5e
    ff = jnp.dot(hff.astype(jnp.bfloat16), w2[...],
                 preferred_element_type=jnp.float32) + c2[...]
    o_ref[0] = _layernorm(x1 + ff, g2[...], b2[...])


def transformer_block(x, mask, lp, n_heads):
    B, S, D = x.shape
    F = lp["w1"].shape[1]
    in_specs = [
        pl.BlockSpec((1, S, D), lambda i: (i, 0, 0)),
        pl.BlockSpec((1, 1, S), lambda i: (i, 0, 0)),
        _const_spec((D, 3 * D)), _const_spec((1, 3 * D)),   # wqkv, bqkv (fused)
        _const_spec((D, D)), _const_spec((1, D)),           # wo, bo
        _const_spec((1, D)), _const_spec((1, D)),           # g1, b1
        _const_spec((D, F)), _const_spec((1, F)),           # w1, c1
        _const_spec((F, D)), _const_spec((1, D)),           # w2, c2
        _const_spec((1, D)), _const_spec((1, D)),           # g2, b2
    ]
    operands = (x, mask,
                lp["wqkv"], lp["bqkv"], lp["wo"], lp["bo"],
                lp["g1"], lp["b1"], lp["w1"], lp["c1"],
                lp["w2"], lp["c2"], lp["g2"], lp["b2"])
    stream = 4 * (2 * S * D + S)                                   # x + out + mask blocks
    live = 4 * (3 * S * D + 2 * n_heads * S * S + 2 * S * F + 4 * S * D)
    return pl.pallas_call(
        partial(_block_kernel, n_heads=n_heads, act_dtype=_ACT_DTYPE),
        out_shape=jax.ShapeDtypeStruct((B, S, D), jnp.float32),
        grid=(B,),
        in_specs=in_specs,
        out_specs=pl.BlockSpec((1, S, D), lambda i: (i, 0, 0)),
        compiler_params=_compiler_params(("parallel",), operands[2:], stream, live),
    )(*operands)


# ----------------------------- pretrain heads kernels -----------------------------

def _pool_mlm_kernel(hcls_ref, hm_ref,
                     fcw, fcb, clfw, clfb, linw, linb, ng, nb,
                     clsf_ref, hm2_ref):
    # pooled = tanh(fc(h[:, 0]));  logits_clsf = classifier(pooled)
    hcls = hcls_ref[0].astype(jnp.bfloat16)                         # [1, D]
    pooled = jnp.tanh(jnp.dot(hcls, fcw[...],
                              preferred_element_type=jnp.float32) + fcb[...])
    clsf_ref[0] = jnp.dot(pooled.astype(jnp.bfloat16), clfw[...],
                          preferred_element_type=jnp.float32) + clfb[...]
    # h_masked -> norm(gelu(linear(h_masked))); emitted in bf16 for the decoder matmul.
    hm = hm_ref[0].astype(jnp.bfloat16)                             # [M, D]
    hm2 = _gelu(jnp.dot(hm, linw[...],
                        preferred_element_type=jnp.float32) + linb[...])
    hm2_ref[0] = _layernorm(hm2, ng[...], nb[...]).astype(jnp.bfloat16)


def _decoder_kernel(hm2_ref, decw_ref, decb_ref, lm_ref):
    # Tied-embedding decoder, tiled over the vocab axis: each weight tile is streamed
    # from HBM exactly once and multiplied against all B*M masked rows at once.
    lm_ref[...] = jnp.dot(hm2_ref[...], decw_ref[...],
                          preferred_element_type=jnp.float32) + decb_ref[...]


def _pad_vocab(V):
    if V <= VOCAB_TILE:
        return V                     # single full-width (lane-dense) block is allowed
    return ((V + VOCAB_TILE - 1) // VOCAB_TILE) * VOCAB_TILE


def bert_heads(h_cls, h_masked, p):
    B, _, D = h_cls.shape
    M = h_masked.shape[1]
    V = p["tok_embed"].shape[0]
    V_pad = p["dec_w"].shape[1]
    TV = V_pad if V_pad <= VOCAB_TILE else VOCAB_TILE
    nv = V_pad // TV

    # --- pooled/classifier + MLM transform (grid over batch, both TCs usable) ---
    pool_ops = (h_cls, h_masked,
                p["fc_w"], p["fc_b"], p["clf_w"], p["clf_b"],
                p["lin_w"], p["lin_b"], p["nrm_g"], p["nrm_b"])
    clsf, hm2 = pl.pallas_call(
        _pool_mlm_kernel,
        out_shape=(jax.ShapeDtypeStruct((B, 1, 2), jnp.float32),
                   jax.ShapeDtypeStruct((B, M, D), jnp.bfloat16)),
        grid=(B,),
        in_specs=[
            pl.BlockSpec((1, 1, D), lambda i: (i, 0, 0)),
            pl.BlockSpec((1, M, D), lambda i: (i, 0, 0)),
            _const_spec((D, D)), _const_spec((1, D)),      # fc
            _const_spec((D, 2)), _const_spec((1, 2)),      # classifier
            _const_spec((D, D)), _const_spec((1, D)),      # linear
            _const_spec((1, D)), _const_spec((1, D)),      # norm
        ],
        out_specs=(pl.BlockSpec((1, 1, 2), lambda i: (i, 0, 0)),
                   pl.BlockSpec((1, M, D), lambda i: (i, 0, 0))),
        compiler_params=_compiler_params(("parallel",), pool_ops[2:],
                                         4 * (M + 1) * D + 2 * M * D, 4 * M * D),
    )(*pool_ops)

    # --- decoder: grid over vocab tiles only; weights loaded once, M dim = B*M ---
    hm2_flat = hm2.reshape(B * M, D)
    dec_ops = (hm2_flat, p["dec_w"], p["dec_b"])
    stream = 2 * D * TV + 4 * TV + 4 * (B * M) * TV
    lm = pl.pallas_call(
        _decoder_kernel,
        out_shape=jax.ShapeDtypeStruct((B * M, V_pad), jnp.float32),
        grid=(nv,),
        in_specs=[
            _const_spec((B * M, D)),                         # hm2 resident across all tiles
            pl.BlockSpec((D, TV), lambda v: (0, v)),         # decoder weight tile
            pl.BlockSpec((1, TV), lambda v: (0, v)),         # decoder bias tile
        ],
        out_specs=pl.BlockSpec((B * M, TV), lambda v: (0, v)),
        compiler_params=_compiler_params(("parallel",), (hm2_flat,), stream, 0),
    )(*dec_ops)

    logits_lm = lm.reshape(B, M, V_pad)[:, :, :V]            # drop vocab padding
    return logits_lm, clsf[:, 0, :]


# ----------------------------- full forward -----------------------------

def bert_pretrain_forward(params, input_ids, segment_ids, input_mask, masked_pos, cfg):
    B, S = input_ids.shape
    # Embedding-table gathers are host-level glue; the add + LayerNorm run in a kernel.
    e_tok = params["tok_embed"][input_ids]                     # [B, S, D]
    e_seg = params["seg_embed"][segment_ids]                   # [B, S, D]
    e_pos = params["pos_embed"][:S][None, :, :]                # [1, S, D]
    h = embed_layernorm(e_tok, e_pos, e_seg, params["emb_g"], params["emb_b"])

    mask = input_mask.astype(jnp.float32).reshape(B, 1, S)
    for lp in params["layers"]:
        h = transformer_block(h, mask, lp, cfg["n_heads"])

    # torch.gather(h, 1, masked_pos[:, :, None].expand(-1, -1, D))  (glue)
    h_masked = jnp.take_along_axis(h, masked_pos[:, :, None].astype(jnp.int32), axis=1)
    h_cls = h[:, 0:1, :]                                       # [B, 1, D]
    return bert_heads(h_cls, h_masked, params)


# ----------------------------- deterministic parameter init -----------------------------

def init_params(key, cfg):
    D, F, V = cfg["dim"], cfg["dim_ff"], cfg["vocab_size"]

    def nrm(k, shape, dtype=jnp.bfloat16, scale=0.02):
        return (scale * jax.random.normal(k, shape, dtype=jnp.float32)).astype(dtype)

    keys = iter(jax.random.split(key, 128))
    p = {
        "tok_embed": nrm(next(keys), (V, D), jnp.float32),
        "pos_embed": nrm(next(keys), (cfg["max_len"], D), jnp.float32),
        "seg_embed": nrm(next(keys), (cfg["n_segments"], D), jnp.float32),
        "emb_g": jnp.ones((1, D), jnp.float32),
        "emb_b": jnp.zeros((1, D), jnp.float32),
        "layers": [],
    }
    for _ in range(cfg["n_layers"]):
        p["layers"].append({
            # Q|K|V fused along the output axis: [D, 3D] bf16 weight, [1, 3D] f32 bias.
            "wqkv": nrm(next(keys), (D, 3 * D)), "bqkv": jnp.zeros((1, 3 * D), jnp.float32),
            "wo": nrm(next(keys), (D, D)), "bo": jnp.zeros((1, D), jnp.float32),
            "g1": jnp.ones((1, D), jnp.float32), "b1": jnp.zeros((1, D), jnp.float32),
            "w1": nrm(next(keys), (D, F)), "c1": jnp.zeros((1, F), jnp.float32),
            "w2": nrm(next(keys), (F, D)), "c2": jnp.zeros((1, D), jnp.float32),
            "g2": jnp.ones((1, D), jnp.float32), "b2": jnp.zeros((1, D), jnp.float32),
        })
    p.update({
        "fc_w": nrm(next(keys), (D, D)), "fc_b": jnp.zeros((1, D), jnp.float32),
        "lin_w": nrm(next(keys), (D, D)), "lin_b": jnp.zeros((1, D), jnp.float32),
        "nrm_g": jnp.ones((1, D), jnp.float32), "nrm_b": jnp.zeros((1, D), jnp.float32),
        "clf_w": nrm(next(keys), (D, 2)), "clf_b": jnp.zeros((1, 2), jnp.float32),
    })
    # Weight tying: decoder.weight = tok_embed.weight (bf16 for the MXU path), padded
    # to a multiple of VOCAB_TILE so the decoder stays lane-dense and double-buffered;
    # padded logit columns are sliced off after the kernel.
    V_pad = _pad_vocab(V)
    dec_w = p["tok_embed"].T.astype(jnp.bfloat16)
    if V_pad > V:
        dec_w = jnp.pad(dec_w, ((0, 0), (0, V_pad - V)))
    p["dec_w"] = dec_w
    p["dec_b"] = jnp.zeros((1, V_pad), jnp.float32)   # nn.Parameter(torch.zeros(n_vocab)), padded
    return p


# ----------------------------- main -----------------------------

if __name__ == "__main__":
    cfg = dict(vocab_size=64, dim=32, n_layers=2, n_heads=4, dim_ff=64,
               max_len=16, n_segments=2)
    B, S, M = 2, 8, 4

    key = jax.random.PRNGKey(0)
    kp, kid, kseg, kpos = jax.random.split(key, 4)
    params = init_params(kp, cfg)

    input_ids = jax.random.randint(kid, (B, S), 0, cfg["vocab_size"], dtype=jnp.int32)
    segment_ids = jax.random.randint(kseg, (B, S), 0, cfg["n_segments"], dtype=jnp.int32)
    input_mask = jnp.ones((B, S), jnp.int32).at[1, -2:].set(0)
    masked_pos = jax.random.randint(kpos, (B, M), 0, S, dtype=jnp.int32)

    logits_lm, logits_clsf = bert_pretrain_forward(
        params, input_ids, segment_ids, input_mask, masked_pos, cfg)
    jax.block_until_ready((logits_lm, logits_clsf))

    assert logits_lm.shape == (B, M, cfg["vocab_size"])
    assert logits_clsf.shape == (B, 2)
    assert bool(jnp.all(jnp.isfinite(logits_lm))) and bool(jnp.all(jnp.isfinite(logits_clsf)))
    print("KERNEL_OK")
</pallas_src>

<mosaic_0001>
module attributes {stable_mosaic.version = 11 : i64} {
  func.func @_embed_ln_kernel(%arg0: i32, %arg1: memref<1x8x32xf32, #tpu.memory_space<vmem>>, %arg2: memref<1x8x32xf32, #tpu.memory_space<vmem>>, %arg3: memref<1x8x32xf32, #tpu.memory_space<vmem>>, %arg4: memref<1x32xf32, #tpu.memory_space<vmem>>, %arg5: memref<1x32xf32, #tpu.memory_space<vmem>>, %arg6: memref<1x8x32xf32, #tpu.memory_space<vmem>>) attributes {dimension_semantics = [#tpu.dimension_semantics<parallel>], iteration_bounds = array<i64: 2>, scalar_prefetch = 0 : i64, scratch_operands = 0 : i64, tpu.core_type = #tpu.core_type<tc>, window_params = [{transform_indices = @transform_0, window_bounds = array<i64: 1, 8, 32>}, {pipeline_mode = #tpu.pipeline_mode<synchronous>, transform_indices = @transform_1, window_bounds = array<i64: 1, 8, 32>}, {transform_indices = @transform_2, window_bounds = array<i64: 1, 8, 32>}, {pipeline_mode = #tpu.pipeline_mode<synchronous>, transform_indices = @transform_3, window_bounds = array<i64: 1, 32>}, {pipeline_mode = #tpu.pipeline_mode<synchronous>, transform_indices = @transform_4, window_bounds = array<i64: 1, 32>}, {transform_indices = @transform_5, window_bounds = array<i64: 1, 8, 32>}]} {
    %c0 = arith.constant 0 : index
    %c0_0 = arith.constant 0 : index
    %c0_1 = arith.constant 0 : index
    %0 = vector.load %arg1[%c0, %c0_0, %c0_1] : memref<1x8x32xf32, #tpu.memory_space<vmem>>, vector<1x8x32xf32>
    %1 = vector.shape_cast %0 : vector<1x8x32xf32> to vector<8x32xf32>
    %c0_2 = arith.constant 0 : index
    %c0_3 = arith.constant 0 : index
    %c0_4 = arith.constant 0 : index
    %2 = vector.load %arg2[%c0_2, %c0_3, %c0_4] : memref<1x8x32xf32, #tpu.memory_space<vmem>>, vector<1x8x32xf32>
    %3 = vector.shape_cast %2 : vector<1x8x32xf32> to vector<8x32xf32>
    %4 = arith.addf %1, %3 : vector<8x32xf32>
    %c0_5 = arith.constant 0 : index
    %c0_6 = arith.constant 0 : index
    %c0_7 = arith.constant 0 : index
    %5 = vector.load %arg3[%c0_5, %c0_6, %c0_7] : memref<1x8x32xf32, #tpu.memory_space<vmem>>, vector<1x8x32xf32>
    %6 = vector.shape_cast %5 : vector<1x8x32xf32> to vector<8x32xf32>
    %7 = arith.addf %4, %6 : vector<8x32xf32>
    %c0_8 = arith.constant 0 : index
    %c0_9 = arith.constant 0 : index
    %8 = vector.load %arg4[%c0_8, %c0_9] : memref<1x32xf32, #tpu.memory_space<vmem>>, vector<1x32xf32>
    %c0_10 = arith.constant 0 : index
    %c0_11 = arith.constant 0 : index
    %9 = vector.load %arg5[%c0_10, %c0_11] : memref<1x32xf32, #tpu.memory_space<vmem>>, vector<1x32xf32>
    %cst = arith.constant dense<0.000000e+00> : vector<8xf32>
    %10 = vector.multi_reduction <add>, %7, %cst [1] : vector<8x32xf32> to vector<8xf32>
    %11 = vector.shape_cast %10 : vector<8xf32> to vector<8x1xf32>
    %cst_12 = arith.constant 3.200000e+01 : f32
    %12 = vector.broadcast %cst_12 : f32 to vector<8x1xf32>
    %13 = arith.divf %11, %12 : vector<8x1xf32>
    %14 = vector.broadcast %13 : vector<8x1xf32> to vector<8x32xf32>
    %15 = arith.subf %7, %14 : vector<8x32xf32>
    %16 = arith.mulf %15, %15 : vector<8x32xf32>
    %cst_13 = arith.constant dense<0.000000e+00> : vector<8xf32>
    %17 = vector.multi_reduction <add>, %16, %cst_13 [1] : vector<8x32xf32> to vector<8xf32>
    %18 = vector.shape_cast %17 : vector<8xf32> to vector<8x1xf32>
    %cst_14 = arith.constant 3.200000e+01 : f32
    %19 = vector.broadcast %cst_14 : f32 to vector<8x1xf32>
    %20 = arith.divf %18, %19 : vector<8x1xf32>
    %21 = vector.broadcast %13 : vector<8x1xf32> to vector<8x32xf32>
    %22 = arith.subf %7, %21 : vector<8x32xf32>
    %cst_15 = arith.constant 9.99999996E-13 : f32
    %23 = vector.broadcast %cst_15 : f32 to vector<8x1xf32>
    %24 = arith.addf %20, %23 : vector<8x1xf32>
    %25 = math.rsqrt %24 : vector<8x1xf32>
    %26 = vector.broadcast %25 : vector<8x1xf32> to vector<8x32xf32>
    %27 = arith.mulf %22, %26 : vector<8x32xf32>
    %28 = vector.broadcast %8 : vector<1x32xf32> to vector<8x32xf32>
    %29 = arith.mulf %28, %27 : vector<8x32xf32>
    %30 = vector.broadcast %9 : vector<1x32xf32> to vector<8x32xf32>
    %31 = arith.addf %29, %30 : vector<8x32xf32>
    %c0_16 = arith.constant 0 : index
    %c0_17 = arith.constant 0 : index
    %c0_18 = arith.constant 0 : index
    %32 = vector.load %arg6[%c0_16, %c0_17, %c0_18] : memref<1x8x32xf32, #tpu.memory_space<vmem>>, vector<1x8x32xf32>
    %33 = vector.shape_cast %32 : vector<1x8x32xf32> to vector<8x32xf32>
    %34 = vector.shape_cast %31 : vector<8x32xf32> to vector<1x8x32xf32>
    tpu.vector_store %arg6[%c0_16, %c0_17, %c0_18], %34 {strides = array<i32>} : memref<1x8x32xf32, #tpu.memory_space<vmem>>, vector<1x8x32xf32>,
    return
  }
  func.func @transform_0(%arg0: i32) -> (i32, i32, i32) {
    %c0_i32 = arith.constant 0 : i32
    %c0_i32_0 = arith.constant 0 : i32
    %c0_i32_1 = arith.constant 0 : i32
    return %arg0, %c0_i32, %c0_i32_0 : i32, i32, i32
  }
  func.func @transform_1(%arg0: i32) -> (i32, i32, i32) {
    %c0_i32 = arith.constant 0 : i32
    %c0_i32_0 = arith.constant 0 : i32
    %c0_i32_1 = arith.constant 0 : i32
    %c0_i32_2 = arith.constant 0 : i32
    return %c0_i32, %c0_i32_0, %c0_i32_1 : i32, i32, i32
  }
  func.func @transform_2(%arg0: i32) -> (i32, i32, i32) {
    %c0_i32 = arith.constant 0 : i32
    %c0_i32_0 = arith.constant 0 : i32
    %c0_i32_1 = arith.constant 0 : i32
    return %arg0, %c0_i32, %c0_i32_0 : i32, i32, i32
  }
  func.func @transform_3(%arg0: i32) -> (i32, i32) {
    %c0_i32 = arith.constant 0 : i32
    %c0_i32_0 = arith.constant 0 : i32
    %c0_i32_1 = arith.constant 0 : i32
    return %c0_i32, %c0_i32_0 : i32, i32
  }
  func.func @transform_4(%arg0: i32) -> (i32, i32) {
    %c0_i32 = arith.constant 0 : i32
    %c0_i32_0 = arith.constant 0 : i32
    %c0_i32_1 = arith.constant 0 : i32
    return %c0_i32, %c0_i32_0 : i32, i32
  }
  func.func @transform_5(%arg0: i32) -> (i32, i32, i32) {
    %c0_i32 = arith.constant 0 : i32
    %c0_i32_0 = arith.constant 0 : i32
    %c0_i32_1 = arith.constant 0 : i32
    return %arg0, %c0_i32, %c0_i32_0 : i32, i32, i32
  }
}

</mosaic_0001>

<llo_original>
// kernel: tpu_custom_call.1
$region0: #{tpu_custom_call.1}
  #allocation0 [shape = 'u32[]', space=smem, size = 0x4, offset = 0x4, fixed_abs, tag = 'smem constant byte address 0x4 - core index']
  #allocation1 [shape = 'u32[144,128]{1,0:T(1,128)}', space=vmem, size = 0x12000, scoped, tag = 'internal scratch']
  %s0 = inlined_call_operand.hbm [shape: f32[2,8,32], index: 0, kind: input, shape index: {}]
  %s1 = inlined_call_operand.hbm [shape: f32[1,8,32], index: 1, kind: input, shape index: {}]
  %s2 = inlined_call_operand.hbm [shape: f32[2,8,32], index: 2, kind: input, shape index: {}]
  %s3 = inlined_call_operand.vmem [shape: f32[1,32], index: 3, kind: input, shape index: {}]
  %s4 = inlined_call_operand.vmem [shape: f32[1,32], index: 4, kind: input, shape index: {}]
  %s5 = inlined_call_operand.hbm [shape: f32[2,8,32], index: 5, kind: output, shape index: {}]
  %s6 = sld [smem:[#allocation0]]
  $region65: #{tpu_custom_call.1} parent=0
    _
  %s8 = ssub.s32 1, %s6
  %s9 = scalar_select 0, %s8, %s6
  $region1: #{tpu_custom_call.1} parent=0
    #allocation2 [shape = 'u8[8192]{0}', space=vmem, size = 0x2000, scoped, tag = 'input window, operand 0']
    #allocation3 [shape = 's32[2]{0}', space=sflag, size = 0x8, scoped, tag = 'scoped memory for tpu_custom_call.1']
    #allocation4 [shape = 's32[2]{0}', space=sflag, size = 0x8, scoped, tag = 'scoped memory for tpu_custom_call.1']
    #allocation5 [shape = 'u8[4096]{0}', space=vmem, size = 0x1000, scoped, tag = 'input window, operand 1, single buffered']
    #allocation6 [shape = 's32[1]{0}', space=sflag, size = 0x4, scoped, tag = 'scoped memory for tpu_custom_call.1']
    #allocation7 [shape = 'u8[8192]{0}', space=vmem, size = 0x2000, scoped, tag = 'input window, operand 2']
    #allocation8 [shape = 'u8[8192]{0}', space=vmem, size = 0x2000, scoped, tag = 'output window, operand 0']
    %10 = vsyncpa [#allocation3], 0
    %s11 = scalar_lea.sflag [#allocation3], 1
    %12 = vsyncpa %s11, 0
    %13 = vsyncpa [#allocation6], 0
    %14 = vsyncpa [#allocation4], 0
    %s15 = scalar_lea.sflag [#allocation4], 1
    %16 = vsyncpa %s15, 0
    loop: start=0, step=1, limit=4
    $region2: #{tpu_custom_call.1} parent=1 // loop_pre_header
      _
    $region3: #{tpu_custom_call.1} parent=1 // loop_header
      %s18 = sphi 0, %s22
      %p19 = scmp.ge.s32.totalorder %s18, 4
      %s28 = sphi 0, %s30
      %s31 = sphi 0, %s28
      %s32 = sphi 0, %s31
      %s48 = sphi 0, %s32
      %s52 = sphi 0, %s52
      %s54 = sphi 0, %s52
      %s55 = sphi 0, %s54
      %s69 = sphi 0, %s55
      %s75 = sphi 0, %s77
      %s78 = sphi 0, %s75
      %s79 = sphi 0, %s78
      %s95 = sphi 0, %s79
      %s99 = sphi 0, %s99
      %s101 = sphi 0, %s99
      %s102 = sphi 0, %s101
      %s116 = sphi 0, %s102
      %s120 = sphi 0, %s120
      %s122 = sphi 0, %s120
      %s123 = sphi 0, %s122
      %s137 = sphi 0, %s123
      %s143 = sphi 0, %s145
      %s146 = sphi 0, %s143
      %s147 = sphi 0, %s146
      %s163 = sphi 0, %s147
    $region4: #{tpu_custom_call.1} parent=1 // loop_header_branch
      %21 = sbr.rel (%p19) target = $region8
    $region5: #{tpu_custom_call.1} parent=1 // loop_body
      %s23 = ssub.s32 %s18, 1
      %s24 = ssub.s32 %s18, 2
      %s25 = sadd.s32 %s18, 1
      %s26 = ssub.s32 %s18, %s25
      %p27 = scmp.eq.s32.totalorder %s26, 0
      %s29 = sadd.s32 %s28, 1
      %s30 = scalar_select %p27, %s28, %s29
      %p33 = pneg %p27
      %p34 = scmp.eq.s32.totalorder %s18, 1
      %p35 = por %p33, %p34
      %p36 = scmp.ne.s32.totalorder %s28, %s31
      %p37 = scmp.eq.s32.totalorder %s18, 0
      %p38 = por %p36, %p37
      %p39 = scmp.ne.s32.totalorder %s28, %s31
      %p40 = scmp.eq.s32.totalorder %s23, 1
      %p41 = por %p39, %p40
      %p42 = scmp.ne.s32.totalorder %s31, %s32
      %p43 = scmp.eq.s32.totalorder %s23, 0
      %p44 = por %p42, %p43
      %p45 = scmp.ne.s32.totalorder %s31, %s32
      %p46 = scmp.eq.s32.totalorder %s24, 1
      %p47 = por %p45, %p46
      %p49 = scmp.ne.s32.totalorder %s32, %s48
      %p50 = scmp.eq.s32.totalorder %s24, 0
      %p51 = por %p49, %p50
      %s53 = sadd.s32 %s52, 1
      %p56 = scmp.eq.s32.totalorder %s18, 1
      %p57 = scmp.ne.s32.totalorder %s52, %s54
      %p58 = scmp.eq.s32.totalorder %s18, 0
      %p59 = por %p57, %p58
      %p60 = scmp.ne.s32.totalorder %s52, %s54
      %p61 = scmp.eq.s32.totalorder %s23, 1
      %p62 = por %p60, %p61
      %p63 = scmp.ne.s32.totalorder %s54, %s55
      %p64 = scmp.eq.s32.totalorder %s23, 0
      %p65 = por %p63, %p64
      %p66 = scmp.ne.s32.totalorder %s54, %s55
      %p67 = scmp.eq.s32.totalorder %s24, 1
      %p68 = por %p66, %p67
      %p70 = scmp.ne.s32.totalorder %s55, %s69
      %p71 = scmp.eq.s32.totalorder %s24, 0
      %p72 = por %p70, %p71
      %s73 = ssub.s32 %s18, %s25
      %p74 = scmp.eq.s32.totalorder %s73, 0
      %s76 = sadd.s32 %s75, 1
      %s77 = scalar_select %p74, %s75, %s76
      %p80 = pneg %p74
      %p81 = scmp.eq.s32.totalorder %s18, 1
      %p82 = por %p80, %p81
      %p83 = scmp.ne.s32.totalorder %s75, %s78
      %p84 = scmp.eq.s32.totalorder %s18, 0
      %p85 = por %p83, %p84
      %p86 = scmp.ne.s32.totalorder %s75, %s78
      %p87 = scmp.eq.s32.totalorder %s23, 1
      %p88 = por %p86, %p87
      %p89 = scmp.ne.s32.totalorder %s78, %s79
      %p90 = scmp.eq.s32.totalorder %s23, 0
      %p91 = por %p89, %p90
      %p92 = scmp.ne.s32.totalorder %s78, %s79
      %p93 = scmp.eq.s32.totalorder %s24, 1
      %p94 = por %p92, %p93
      %p96 = scmp.ne.s32.totalorder %s79, %s95
      %p97 = scmp.eq.s32.totalorder %s24, 0
      %p98 = por %p96, %p97
      %s100 = sadd.s32 %s99, 1
      %p103 = scmp.eq.s32.totalorder %s18, 1
      %p104 = scmp.ne.s32.totalorder %s99, %s101
      %p105 = scmp.eq.s32.totalorder %s18, 0
      %p106 = por %p104, %p105
      %p107 = scmp.ne.s32.totalorder %s99, %s101
      %p108 = scmp.eq.s32.totalorder %s23, 1
      %p109 = por %p107, %p108
      %p110 = scmp.ne.s32.totalorder %s101, %s102
      %p111 = scmp.eq.s32.totalorder %s23, 0
      %p112 = por %p110, %p111
      %p113 = scmp.ne.s32.totalorder %s101, %s102
      %p114 = scmp.eq.s32.totalorder %s24, 1
      %p115 = por %p113, %p114
      %p117 = scmp.ne.s32.totalorder %s102, %s116
      %p118 = scmp.eq.s32.totalorder %s24, 0
      %p119 = por %p117, %p118
      %s121 = sadd.s32 %s120, 1
      %p124 = scmp.eq.s32.totalorder %s18, 1
      %p125 = scmp.ne.s32.totalorder %s120, %s122
      %p126 = scmp.eq.s32.totalorder %s18, 0
      %p127 = por %p125, %p126
      %p128 = scmp.ne.s32.totalorder %s120, %s122
      %p129 = scmp.eq.s32.totalorder %s23, 1
      %p130 = por %p128, %p129
      %p131 = scmp.ne.s32.totalorder %s122, %s123
      %p132 = scmp.eq.s32.totalorder %s23, 0
      %p133 = por %p131, %p132
      %p134 = scmp.ne.s32.totalorder %s122, %s123
      %p135 = scmp.eq.s32.totalorder %s24, 1
      %p136 = por %p134, %p135
      %p138 = scmp.ne.s32.totalorder %s123, %s137
      %p139 = scmp.eq.s32.totalorder %s24, 0
      %p140 = por %p138, %p139
      %s141 = ssub.s32 %s18, %s25
      %p142 = scmp.eq.s32.totalorder %s141, 0
      %s144 = sadd.s32 %s143, 1
      %s145 = scalar_select %p142, %s143, %s144
      %p148 = pneg %p142
      %p149 = scmp.eq.s32.totalorder %s18, 1
      %p150 = por %p148, %p149
      %p151 = scmp.ne.s32.totalorder %s143, %s146
      %p152 = scmp.eq.s32.totalorder %s18, 0
      %p153 = por %p151, %p152
      %p154 = scmp.ne.s32.totalorder %s143, %s146
      %p155 = scmp.eq.s32.totalorder %s23, 1
      %p156 = por %p154, %p155
      %p157 = scmp.ne.s32.totalorder %s146, %s147
      %p158 = scmp.eq.s32.totalorder %s23, 0
      %p159 = por %p157, %p158
      %p160 = scmp.ne.s32.totalorder %s146, %s147
      %p161 = scmp.eq.s32.totalorder %s24, 1
      %p162 = por %p160, %p161
      %p164 = scmp.ne.s32.totalorder %s147, %s163
      %p165 = scmp.eq.s32.totalorder %s24, 0
      %p166 = por %p164, %p165
      %p167 = scmp.le.s32.totalorder 1, %s18
      %p168 = scmp.lt.s32.totalorder %s18, 3
      %p169 = pnand %p167, %p168
      %p170 = pneg %p169
      // Predicated region
      $region9: #{tpu_custom_call.1} parent=5 // pred_check
        _
      $region10: #{tpu_custom_call.1} parent=5 // pred_check_branch
        %172 = sbr.rel (%p169) target = $region12
      $region11: #{tpu_custom_call.1} parent=5 // pred_region
        %s173 = ssub.s32 %s18, 1
        // Predicated region
        $region13: #{tpu_custom_call.1} parent=11 // pred_check
          %p174 = pneg %p65
        $region14: #{tpu_custom_call.1} parent=11 // pred_check_branch
          %176 = sbr.rel (%p174) target = $region16
        $region15: #{tpu_custom_call.1} parent=11 // pred_region
          %s178 = ssub.s32 128, 128
          %179 = vsyncadd [#allocation6], %s178
          %s181 = sshll.u32 [#allocation5], 4
          %s182 = int_to_ptr.vmem [resolvable:$true] %s181
          %184 = dma.hbm_to_vmem [thread:$0]  %s1, 128, %s182, [#allocation6]
        $region16: #{tpu_custom_call.1} parent=11 // pred_fallthru
          _
        // Predicated region
        $region17: #{tpu_custom_call.1} parent=11 // pred_check
          %p185 = pneg %p112
        $region18: #{tpu_custom_call.1} parent=11 // pred_check_branch
          %187 = sbr.rel (%p185) target = $region20
        $region19: #{tpu_custom_call.1} parent=11 // pred_region
          _
        $region20: #{tpu_custom_call.1} parent=11 // pred_fallthru
          _
        // Predicated region
        $region21: #{tpu_custom_call.1} parent=11 // pred_check
          %p188 = pneg %p133
        $region22: #{tpu_custom_call.1} parent=11 // pred_check_branch
          %190 = sbr.rel (%p188) target = $region24
        $region23: #{tpu_custom_call.1} parent=11 // pred_region
          _
        $region24: #{tpu_custom_call.1} parent=11 // pred_fallthru
          _
      $region12: #{tpu_custom_call.1} parent=5 // pred_fallthru
        _
      %p191 = scmp.lt.s32.totalorder %s18, 2
      // Predicated region
      $region25: #{tpu_custom_call.1} parent=5 // pred_check
        %p192 = pneg %p191
      $region26: #{tpu_custom_call.1} parent=5 // pred_check_branch
        %194 = sbr.rel (%p192) target = $region28
      $region27: #{tpu_custom_call.1} parent=5 // pred_region
        // Predicated region
        $region29: #{tpu_custom_call.1} parent=27 // pred_check
          %p195 = pneg %p38
        $region30: #{tpu_custom_call.1} parent=27 // pred_check_branch
          %197 = sbr.rel (%p195) target = $region32
        $region31: #{tpu_custom_call.1} parent=27 // pred_region
          %s198 = sand.u32 %s18, 1
          %s199 = scalar_lea.sflag [#allocation3], %s198
          %s200 = sand.u32 %s28, 1
          %s201 = smul.addr %s200, 8
          %s202 = scalar_lea.vmem [#allocation2], %s201
          %s204 = ssub.s32 128, 128
          %205 = vsyncadd %s199, %s204
          %s206 = smul.addr %s18, 128
          %s207 = scalar_lea.hbm %s0, %s206
          %s209 = sshll.u32 %s202, 4
          %s210 = int_to_ptr.vmem [resolvable:$true] %s209
          %212 = dma.hbm_to_vmem [thread:$0]  %s207, 128, %s210, %s199
        $region32: #{tpu_custom_call.1} parent=27 // pred_fallthru
          _
        // Predicated region
        $region33: #{tpu_custom_call.1} parent=27 // pred_check
          %p213 = pneg %p85
        $region34: #{tpu_custom_call.1} parent=27 // pred_check_branch
          %215 = sbr.rel (%p213) target = $region36
        $region35: #{tpu_custom_call.1} parent=27 // pred_region
          %s216 = sand.u32 %s18, 1
          %s217 = scalar_lea.sflag [#allocation3], %s216
          %s218 = sand.u32 %s75, 1
          %s219 = smul.addr %s218, 8
          %s220 = scalar_lea.vmem [#allocation7], %s219
          %s222 = ssub.s32 128, 128
          %223 = vsyncadd %s217, %s222
          %s224 = smul.addr %s18, 128
          %s225 = scalar_lea.hbm %s2, %s224
          %s227 = sshll.u32 %s220, 4
          %s228 = int_to_ptr.vmem [resolvable:$true] %s227
          %230 = dma.hbm_to_vmem [thread:$0]  %s225, 128, %s228, %s217
        $region36: #{tpu_custom_call.1} parent=27 // pred_fallthru
          _
      $region28: #{tpu_custom_call.1} parent=5 // pred_fallthru
        _
      %p231 = scmp.le.s32.totalorder 1, %s18
      %p232 = scmp.lt.s32.totalorder %s18, 3
      %p233 = pnand %p231, %p232
      %p234 = pneg %p233
      // Predicated region
      $region37: #{tpu_custom_call.1} parent=5 // pred_check
        _
      $region38: #{tpu_custom_call.1} parent=5 // pred_check_branch
        %236 = sbr.rel (%p233) target = $region40
      $region39: #{tpu_custom_call.1} parent=5 // pred_region
        %s237 = ssub.s32 %s18, 1
        %s238 = sand.u32 %s23, 1
        %s239 = scalar_lea.sflag [#allocation3], %s238
        %s240 = sand.u32 %s31, 1
        %s241 = smul.addr %s240, 8
        %s242 = scalar_lea.vmem [#allocation2], %s241
        // Predicated region
        $region41: #{tpu_custom_call.1} parent=39 // pred_check
          %p243 = pneg %p44
        $region42: #{tpu_custom_call.1} parent=39 // pred_check_branch
          %245 = sbr.rel (%p243) target = $region44
        $region43: #{tpu_custom_call.1} parent=39 // pred_region
          %246 = dma.done %s239, 128
        $region44: #{tpu_custom_call.1} parent=39 // pred_fallthru
          _
        // Predicated region
        $region45: #{tpu_custom_call.1} parent=39 // pred_check
          %p247 = pneg %p65
        $region46: #{tpu_custom_call.1} parent=39 // pred_check_branch
          %249 = sbr.rel (%p247) target = $region48
        $region47: #{tpu_custom_call.1} parent=39 // pred_region
          %250 = dma.done [#allocation6], 128
        $region48: #{tpu_custom_call.1} parent=39 // pred_fallthru
          _
        %s251 = sand.u32 %s23, 1
        %s252 = scalar_lea.sflag [#allocation3], %s251
        %s253 = sand.u32 %s78, 1
        %s254 = smul.addr %s253, 8
        %s255 = scalar_lea.vmem [#allocation7], %s254
        // Predicated region
        $region49: #{tpu_custom_call.1} parent=39 // pred_check
          %p256 = pneg %p91
        $region50: #{tpu_custom_call.1} parent=39 // pred_check_branch
          %258 = sbr.rel (%p256) target = $region52
        $region51: #{tpu_custom_call.1} parent=39 // pred_region
          %259 = dma.done %s252, 128
        $region52: #{tpu_custom_call.1} parent=39 // pred_fallthru
          _
        %s260 = sand.u32 %s23, 1
        %s261 = scalar_lea.sflag [#allocation3], %s260
        %s262 = sand.u32 %s31, 1
        %s263 = smul.addr %s262, 8
        %s264 = scalar_lea.vmem [#allocation2], %s263
        %p265 = pneg %p44
        %p266 = pneg %p41
        %p267 = pneg %p65
        %p268 = pneg %p62
        %s269 = sand.u32 %s23, 1
        %s270 = scalar_lea.sflag [#allocation3], %s269
        %s271 = sand.u32 %s78, 1
        %s272 = smul.addr %s271, 8
        %s273 = scalar_lea.vmem [#allocation7], %s272
        %p274 = pneg %p91
        %p275 = pneg %p88
        %p276 = pneg %p112
        %p277 = pneg %p109
        %p278 = pneg %p133
        %p279 = pneg %p130
        %p280 = pneg %p159
        %p281 = pneg %p156
        %s282 = sand.u32 %s146, 1
        %s283 = scalar_lea.sflag [#allocation4], %s282
        %s284 = sand.u32 %s146, 1
        %s285 = smul.addr %s284, 8
        %s286 = scalar_lea.vmem [#allocation8], %s285
        %v287 = vld [vmem:[%s242] sm:$0xff]
        %v288 = vld [vmem:[#allocation5] sm:$0xff]
        %v289 = vadd.f32 %v287, %v288
        %v290 = vld [vmem:[%s255] sm:$0xff]
        %v291 = vadd.f32 %v289, %v290
        %v292 = vld [vmem:[%s3] sm:$0x1]
        %v293 = vld [vmem:[%s4] sm:$0x1]
        %vm294 = vcmask 261120
        %v295 = vsel %vm294, %v291, 0.0
        %296 = vadd.xlane.f32.xlu0 %v295
        %v297 = vpop.xlane.xlu0 %296
        %v298 = vrcp.pop 32.0
        %v299 = vmul.f32 %v297, %v298
        %v300 = vsub.f32 %v291, %v299
        %v301 = vmul.f32 %v300, %v300
        %v302 = vsel %vm294, %v301, 0.0
        %303 = vadd.xlane.f32.xlu0 %v302
        %v304 = vpop.xlane.xlu0 %303
        %v305 = vmul.f32 %v304, %v298
        %v306 = vadd.f32 %v305, 1e-12
        %v307 = vrsqrt.pop %v306
        %v308 = vmul.f32 %v300, %v307
        %v310 = vlaneseq
        %v311 = vshrl.u32 %v310, 7
        %v312 = vsub.s32 0, %v311
        %v313 = vrot.slane %v292, %v312
        %v315 = vmul.f32 %v313, %v308
        %v317 = vlaneseq
        %v318 = vshrl.u32 %v317, 7
        %v319 = vsub.s32 0, %v318
        %v320 = vrot.slane %v293, %v319
        %v322 = vadd.f32 %v315, %v320
        %323 = vst.msk [vmem:[%s286] sm:$0xff] %vm294, %v322
        %s324 = sand.u32 %s146, 1
        %s325 = scalar_lea.sflag [#allocation4], %s324
        %s326 = sand.u32 %s146, 1
        %s327 = smul.addr %s326, 8
        %s328 = scalar_lea.vmem [#allocation8], %s327
        // Predicated region
        $region53: #{tpu_custom_call.1} parent=39 // pred_check
          %p329 = pneg %p156
        $region54: #{tpu_custom_call.1} parent=39 // pred_check_branch
          %331 = sbr.rel (%p329) target = $region56
        $region55: #{tpu_custom_call.1} parent=39 // pred_region
          %s333 = ssub.s32 128, 128
          %334 = vsyncadd %s325, %s333
          %s335 = smul.addr %s23, 128
          %s336 = scalar_lea.hbm %s5, %s335
          %s338 = sshll.u32 %s328, 4
          %s339 = int_to_ptr.vmem [resolvable:$true] %s338
          %341 = dma.vmem_to_hbm [thread:$0]  %s339, 128, %s336, %s325
        $region56: #{tpu_custom_call.1} parent=39 // pred_fallthru
          _
      $region40: #{tpu_custom_call.1} parent=5 // pred_fallthru
        _
      %p342 = scmp.le.s32.totalorder 2, %s18
      // Predicated region
      $region57: #{tpu_custom_call.1} parent=5 // pred_check
        %p343 = pneg %p342
      $region58: #{tpu_custom_call.1} parent=5 // pred_check_branch
        %345 = sbr.rel (%p343) target = $region60
      $region59: #{tpu_custom_call.1} parent=5 // pred_region
        %s346 = ssub.s32 %s18, 2
        // Predicated region
        $region61: #{tpu_custom_call.1} parent=59 // pred_check
          %p347 = pneg %p162
        $region62: #{tpu_custom_call.1} parent=59 // pred_check_branch
          %349 = sbr.rel (%p347) target = $region64
        $region63: #{tpu_custom_call.1} parent=59 // pred_region
          %s350 = sand.u32 %s147, 1
          %s351 = scalar_lea.sflag [#allocation4], %s350
          %s352 = sand.u32 %s147, 1
          %s353 = smul.addr %s352, 8
          %s354 = scalar_lea.vmem [#allocation8], %s353
          %355 = dma.done %s351, 128
        $region64: #{tpu_custom_call.1} parent=59 // pred_fallthru
          _
      $region60: #{tpu_custom_call.1} parent=5 // pred_fallthru
        _
    $region6: #{tpu_custom_call.1} parent=1 // loop_footer
      %s22 = sadd.s32 1, %s18
    $region7: #{tpu_custom_call.1} parent=1 // loop_footer_branch
      %17 = sbr.rel target = $region3
    $region8: #{tpu_custom_call.1} parent=1 // loop_exit
      _
    %356 = vsyncpa [#allocation3], 1
    %s357 = scalar_lea.sflag [#allocation3], 1
    %358 = vsyncpa %s357, 1
    %359 = vsyncpa [#allocation6], 1
    %360 = vsyncpa [#allocation4], 1
    %s361 = scalar_lea.sflag [#allocation4], 1
    %362 = vsyncpa %s361, 1

</llo_original>
